<compile_context>
chip_gen: v5e
topology: v5e:2x2
jax: 0.10.0
libtpu: 0.0.40
codegen_flags: <defaults>
</compile_context>

<pallas_src>
import functools

import jax
import jax.numpy as jnp
from jax.experimental import pallas as pl
from jax.experimental.pallas import tpu as pltpu


# ---------------------------------------------------------------------------
# Pallas kernel: out = relu(A_hat @ XW + b)
# Output tile (f32) is resident across k and doubles as the accumulator.
# ---------------------------------------------------------------------------
def gcn_relu_kernel(a_ref, xw_ref, b_ref, o_ref, *, tk, xw_resident):
    k = pl.program_id(1)

    @pl.when(k == 0)
    def _():
        o_ref[...] = jnp.zeros_like(o_ref)

    if xw_resident:
        # Whole XW slab lives in VMEM; take the k-th (tk, F_pad) slice.
        xw = xw_ref[pl.ds(pl.multiple_of(k * tk, tk), tk), :]
    else:
        xw = xw_ref[...]

    # bf16 x bf16 -> f32 accumulation on the MXU, directly into the output tile.
    o_ref[...] += jnp.dot(a_ref[...], xw, preferred_element_type=jnp.float32)

    @pl.when(k == pl.num_programs(1) - 1)
    def _():
        o_ref[...] = jnp.maximum(o_ref[...] + b_ref[...], 0.0)


def _round_up(x, m):
    return ((x + m - 1) // m) * m


def _pick_tile(n, candidates):
    for c in candidates:
        if n % c == 0:
            return c
    return n  # unreachable: n is a multiple of 128


# ---------------------------------------------------------------------------
# Build padded, normalized adjacency directly in bf16 (matches PyG gcn_norm).
# ---------------------------------------------------------------------------
def build_norm_adj_padded(edge_index, num_nodes, n_pad, dtype=jnp.bfloat16):
    """edge_index: int array [2, E] with rows (source, target)."""
    src = edge_index[0]
    dst = edge_index[1]
    loop = jnp.arange(num_nodes, dtype=src.dtype)
    src = jnp.concatenate([src, loop])
    dst = jnp.concatenate([dst, loop])
    ones = jnp.ones(src.shape, dtype=jnp.float32)
    deg = jnp.zeros((num_nodes,), jnp.float32).at[dst].add(ones)
    deg_inv_sqrt = jnp.where(deg > 0, jax.lax.rsqrt(deg), 0.0)
    norm = deg_inv_sqrt[src] * deg_inv_sqrt[dst]
    # out[dst] += norm * x_lin[src]  =>  A_hat[dst, src] += norm
    a_hat = jnp.zeros((n_pad, n_pad), dtype).at[dst, src].add(norm.astype(dtype))
    return a_hat


def build_norm_adj(edge_index, num_nodes):
    """Unpadded f32 A_hat (reference / testing only)."""
    return build_norm_adj_padded(edge_index, num_nodes, num_nodes,
                                 dtype=jnp.float32)


# ---------------------------------------------------------------------------
# Forward: relu(A_hat @ (x @ w) + b) with a tiled/pipelined Pallas matmul
# ---------------------------------------------------------------------------
def gcn_forward_pallas(x, w, b, edge_index):
    n = x.shape[0]
    f_out = w.shape[1]

    n_pad = _round_up(max(n, 128), 128)
    f_pad = _round_up(max(f_out, 128), 128)   # lane-dense output slab

    # Dominant HBM stream: padded bf16 adjacency, built once, no f32 N^2 copy.
    a = build_norm_adj_padded(edge_index, n, n_pad, dtype=jnp.bfloat16)

    # Feature transform once, in the wrapper (it is ~F_in/N of the FLOPs).
    xw = jnp.dot(x, w)                                            # (n, f_out) f32
    xw = jnp.pad(xw, ((0, n_pad - n), (0, f_pad - f_out))).astype(jnp.bfloat16)
    b2 = jnp.pad(b, (0, f_pad - f_out)).reshape(1, f_pad).astype(jnp.float32)

    # Bigger tiles (HBM-bound kernel); keep >=2 row tiles for v7x's 2 TCs.
    tm = _pick_tile(n_pad, (512, 256, 128))
    if n_pad >= 256:
        tm = min(tm, n_pad // 2)
    tk = _pick_tile(n_pad, (2048, 1024, 512, 256, 128))
    grid = (n_pad // tm, n_pad // tk)

    # Keep the XW slab fully resident in VMEM when it fits (<= ~8 MiB with
    # double-buffering headroom); otherwise stream it k-sliced.
    xw_resident = (2 * n_pad * f_pad * 2) <= (8 << 20)
    if xw_resident:
        xw_spec = pl.BlockSpec((n_pad, f_pad), lambda i, k: (0, 0))
    else:
        xw_spec = pl.BlockSpec((tk, f_pad), lambda i, k: (k, 0))

    # VMEM working-set estimate (double-buffered) -> explicit scoped limit.
    bytes_a = 2 * tm * tk * 2
    bytes_xw = (2 * n_pad * f_pad * 2) if xw_resident else (2 * tk * f_pad * 2)
    bytes_out = 2 * tm * f_pad * 4
    bytes_b = 2 * f_pad * 4
    est = bytes_a + bytes_xw + bytes_out + bytes_b
    vmem_limit = int(min(64 << 20, max(32 << 20, est + (4 << 20))))

    kernel = functools.partial(gcn_relu_kernel, tk=tk, xw_resident=xw_resident)

    out = pl.pallas_call(
        kernel,
        out_shape=jax.ShapeDtypeStruct((n_pad, f_pad), jnp.float32),
        grid_spec=pltpu.PrefetchScalarGridSpec(
            num_scalar_prefetch=0,
            grid=grid,
            in_specs=[
                pl.BlockSpec((tm, tk), lambda i, k: (i, k)),   # A_hat tile
                xw_spec,                                       # XW (resident/slab)
                pl.BlockSpec((1, f_pad), lambda i, k: (0, 0)), # bias
            ],
            out_specs=pl.BlockSpec((tm, f_pad), lambda i, k: (i, 0)),
        ),
        compiler_params=pltpu.CompilerParams(
            dimension_semantics=("parallel", "arbitrary"),
            vmem_limit_bytes=vmem_limit),
    )(a, xw, b2)

    # Note: padded rows hold relu(bias); they are sliced off here.
    return out[:n, :f_out]


# ---------------------------------------------------------------------------
# Graph_Encoder wrapper (deterministic synthetic parameters)
# ---------------------------------------------------------------------------
class GraphEncoderPallas:
    def __init__(self, encoder_hidden_dim, hidden_dim, edge_index, edge_attr, key):
        self.encoder_hidden_dim = encoder_hidden_dim
        self.hidden_dim = hidden_dim
        self.edge_index = edge_index   # kept for parity with the PyTorch module
        self.edge_attr = edge_attr     # unused by the forward pass (as in reference)
        kw, kb = jax.random.split(key)
        scale = jnp.sqrt(6.0 / (encoder_hidden_dim + hidden_dim))
        self.w = jax.random.uniform(
            kw, (encoder_hidden_dim, hidden_dim), jnp.float32, -scale, scale
        )
        # small nonzero bias so the +b path is exercised numerically
        self.b = jax.random.uniform(kb, (hidden_dim,), jnp.float32, -0.1, 0.1)

    def __call__(self, encoded_feature_matrix, edge_index):
        # As in the reference forward, the *argument* edge_index drives the GCN.
        return gcn_forward_pallas(encoded_feature_matrix, self.w, self.b,
                                  edge_index)


# ---------------------------------------------------------------------------
# Pure-JAX f32 reference for a sanity check
# ---------------------------------------------------------------------------
def gcn_ref(a_hat, x, w, b):
    return jnp.maximum(a_hat @ (x @ w) + b[None, :], 0.0)


if __name__ == "__main__":
    key = jax.random.PRNGKey(0)
    k_feat, k_edge, k_param = jax.random.split(key, 3)

    # small synthetic graph
    num_nodes = 16
    encoder_hidden_dim = 8
    hidden_dim = 32
    num_edges = 24

    x = jax.random.normal(k_feat, (num_nodes, encoder_hidden_dim), jnp.float32)
    edge_index = jax.random.randint(k_edge, (2, num_edges), 0, num_nodes, jnp.int32)
    edge_attr = jnp.ones((num_edges, 1), jnp.float32)  # unused (as in reference)

    model = GraphEncoderPallas(encoder_hidden_dim, hidden_dim,
                               edge_index, edge_attr, k_param)

    y = jax.block_until_ready(model(x, edge_index))

    # verify against the pure-f32 JAX reference (kernel streams bf16 A_hat/XW)
    a_hat = build_norm_adj(edge_index, num_nodes)
    y_ref = gcn_ref(a_hat, x, model.w, model.b)
    assert y.shape == (num_nodes, hidden_dim)
    err = float(jnp.max(jnp.abs(y - y_ref)))
    assert jnp.allclose(y, y_ref, atol=3e-2, rtol=3e-2), f"max abs err {err}"

    print("KERNEL_OK")
</pallas_src>

<mosaic_0001>
module attributes {stable_mosaic.version = 11 : i64} {
  func.func @gcn_relu_kernel(%arg0: i32, %arg1: i32, %arg2: memref<128x128xbf16, #tpu.memory_space<vmem>>, %arg3: memref<128x128xbf16, #tpu.memory_space<vmem>>, %arg4: memref<1x128xf32, #tpu.memory_space<vmem>>, %arg5: memref<128x128xf32, #tpu.memory_space<vmem>>) attributes {dimension_semantics = [#tpu.dimension_semantics<parallel>, #tpu.dimension_semantics<arbitrary>], iteration_bounds = array<i64: 1, 1>, scalar_prefetch = 0 : i64, scratch_operands = 0 : i64, tpu.core_type = #tpu.core_type<tc>, window_params = [{transform_indices = @transform_0, window_bounds = array<i64: 128, 128>}, {pipeline_mode = #tpu.pipeline_mode<synchronous>, transform_indices = @transform_1, window_bounds = array<i64: 128, 128>}, {pipeline_mode = #tpu.pipeline_mode<synchronous>, transform_indices = @transform_2, window_bounds = array<i64: 1, 128>}, {transform_indices = @transform_3, window_bounds = array<i64: 128, 128>}]} {
    %c0_i32 = arith.constant 0 : i32
    %0 = arith.cmpi eq, %arg1, %c0_i32 : i32
    %1 = arith.extui %0 : i1 to i32
    %c0_i32_0 = arith.constant 0 : i32
    %2 = arith.cmpi ne, %1, %c0_i32_0 : i32
    scf.if %2 {
      %cst_9 = arith.constant 0.000000e+00 : f32
      %15 = vector.broadcast %cst_9 : f32 to vector<128x128xf32>
      %c0_10 = arith.constant 0 : index
      %c0_11 = arith.constant 0 : index
      %16 = vector.load %arg5[%c0_10, %c0_11] : memref<128x128xf32, #tpu.memory_space<vmem>>, vector<128x128xf32>
      tpu.vector_store %arg5[%c0_10, %c0_11], %15 {strides = array<i32>} : memref<128x128xf32, #tpu.memory_space<vmem>>, vector<128x128xf32>,
    } else {
    }
    %c128_i32 = arith.constant 128 : i32
    %3 = arith.muli %arg1, %c128_i32 : i32
    %4 = tpu.assume_multiple %3, 128 : i32
    %5 = arith.index_cast %4 : i32 to index
    %c0 = arith.constant 0 : index
    %6 = vector.load %arg3[%5, %c0] : memref<128x128xbf16, #tpu.memory_space<vmem>>, vector<128x128xbf16>
    %c0_1 = arith.constant 0 : index
    %c0_2 = arith.constant 0 : index
    %7 = vector.load %arg5[%c0_1, %c0_2] : memref<128x128xf32, #tpu.memory_space<vmem>>, vector<128x128xf32>
    %c0_3 = arith.constant 0 : index
    %c0_4 = arith.constant 0 : index
    %8 = vector.load %arg2[%c0_3, %c0_4] : memref<128x128xbf16, #tpu.memory_space<vmem>>, vector<128x128xbf16>
    %cst = arith.constant dense<0.000000e+00> : vector<128x128xf32>
    %9 = tpu.matmul %8, %6, %cst {dimension_numbers = #tpu.dot_dimension_numbers<[1], [0], [0], [1], [0, 0, 1, 1], [], []>} : vector<128x128xbf16>, vector<128x128xbf16>, vector<128x128xf32> -> vector<128x128xf32>
    %10 = arith.addf %7, %9 : vector<128x128xf32>
    %c0_5 = arith.constant 0 : index
    %c0_6 = arith.constant 0 : index
    %11 = vector.load %arg5[%c0_5, %c0_6] : memref<128x128xf32, #tpu.memory_space<vmem>>, vector<128x128xf32>
    tpu.vector_store %arg5[%c0_5, %c0_6], %10 {strides = array<i32>} : memref<128x128xf32, #tpu.memory_space<vmem>>, vector<128x128xf32>,
    %c0_i32_7 = arith.constant 0 : i32
    %12 = arith.cmpi eq, %arg1, %c0_i32_7 : i32
    %13 = arith.extui %12 : i1 to i32
    %c0_i32_8 = arith.constant 0 : i32
    %14 = arith.cmpi ne, %13, %c0_i32_8 : i32
    scf.if %14 {
      %c0_9 = arith.constant 0 : index
      %c0_10 = arith.constant 0 : index
      %15 = vector.load %arg5[%c0_9, %c0_10] : memref<128x128xf32, #tpu.memory_space<vmem>>, vector<128x128xf32>
      %c0_11 = arith.constant 0 : index
      %c0_12 = arith.constant 0 : index
      %16 = vector.load %arg4[%c0_11, %c0_12] : memref<1x128xf32, #tpu.memory_space<vmem>>, vector<1x128xf32>
      %17 = vector.broadcast %16 : vector<1x128xf32> to vector<128x128xf32>
      %18 = arith.addf %15, %17 : vector<128x128xf32>
      %cst_13 = arith.constant 0.000000e+00 : f32
      %19 = vector.broadcast %cst_13 : f32 to vector<128x128xf32>
      %20 = arith.maximumf %18, %19 : vector<128x128xf32>
      %c0_14 = arith.constant 0 : index
      %c0_15 = arith.constant 0 : index
      %21 = vector.load %arg5[%c0_14, %c0_15] : memref<128x128xf32, #tpu.memory_space<vmem>>, vector<128x128xf32>
      tpu.vector_store %arg5[%c0_14, %c0_15], %20 {strides = array<i32>} : memref<128x128xf32, #tpu.memory_space<vmem>>, vector<128x128xf32>,
    } else {
    }
    return
  }
  func.func @transform_0(%arg0: i32, %arg1: i32) -> (i32, i32) {
    %c0_i32 = arith.constant 0 : i32
    return %arg0, %arg1 : i32, i32
  }
  func.func @transform_1(%arg0: i32, %arg1: i32) -> (i32, i32) {
    %c0_i32 = arith.constant 0 : i32
    %c0_i32_0 = arith.constant 0 : i32
    %c0_i32_1 = arith.constant 0 : i32
    return %c0_i32, %c0_i32_0 : i32, i32
  }
  func.func @transform_2(%arg0: i32, %arg1: i32) -> (i32, i32) {
    %c0_i32 = arith.constant 0 : i32
    %c0_i32_0 = arith.constant 0 : i32
    %c0_i32_1 = arith.constant 0 : i32
    return %c0_i32, %c0_i32_0 : i32, i32
  }
  func.func @transform_3(%arg0: i32, %arg1: i32) -> (i32, i32) {
    %c0_i32 = arith.constant 0 : i32
    %c0_i32_0 = arith.constant 0 : i32
    return %arg0, %c0_i32 : i32, i32
  }
}

</mosaic_0001>

<llo_original>
// kernel: tpu_custom_call.1
$region0: #{tpu_custom_call.1}
  #allocation0 [shape = 'u32[]', space=smem, size = 0x4, offset = 0x4, fixed_abs, tag = 'smem constant byte address 0x4 - core index']
  #allocation1 [shape = 'u32[72,128]{1,0:T(1,128)}', space=vmem, size = 0x9000, scoped, tag = 'internal scratch']
  %s0 = inlined_call_operand.hbm [shape: bf16[128,128], index: 0, kind: input, shape index: {}]
  %s1 = inlined_call_operand.hbm [shape: bf16[128,128], index: 1, kind: input, shape index: {}]
  %s2 = inlined_call_operand.vmem [shape: f32[1,128], index: 2, kind: input, shape index: {}]
  %s3 = inlined_call_operand.hbm [shape: f32[128,128], index: 3, kind: output, shape index: {}]
  %s4 = sld [smem:[#allocation0]]
  $region38: #{tpu_custom_call.1} parent=0
    _
  %s6 = ssub.s32 1, %s4
  %s7 = scalar_select 0, %s6, %s4
  $region1: #{tpu_custom_call.1} parent=0
    #allocation2 [shape = 'u8[32768]{0}', space=vmem, size = 0x8000, scoped, tag = 'input window, operand 0, single buffered']
    #allocation3 [shape = 's32[1]{0}', space=sflag, size = 0x4, scoped, tag = 'scoped memory for tpu_custom_call.1']
    #allocation4 [shape = 's32[1]{0}', space=sflag, size = 0x4, scoped, tag = 'scoped memory for tpu_custom_call.1']
    #allocation5 [shape = 'u8[32768]{0}', space=vmem, size = 0x8000, scoped, tag = 'input window, operand 1, single buffered']
    #allocation6 [shape = 's32[1]{0}', space=sflag, size = 0x4, scoped, tag = 'scoped memory for tpu_custom_call.1']
    #allocation7 [shape = 'u8[65536]{0}', space=vmem, size = 0x10000, scoped, tag = 'output window, operand 0, single buffered']
    %8 = vsyncpa [#allocation3], 0
    %9 = vsyncpa [#allocation6], 0
    %10 = vsyncpa [#allocation4], 0
    // Predicated region
    $region2: #{tpu_custom_call.1} parent=1 // pred_check
      _
    $region3: #{tpu_custom_call.1} parent=1 // pred_check_branch
      %12 = sbr.rel (0) target = $region5
    $region4: #{tpu_custom_call.1} parent=1 // pred_region
      %14 = vsyncadd [#allocation3], 0
      %s15 = sshll.u32 %s0, 4
      %s16 = int_to_ptr.hbm [resolvable:$true] %s15
      %s17 = sshll.u32 [#allocation2], 4
      %s18 = int_to_ptr.vmem [resolvable:$true] %s17
      %23 = dma.hbm_to_vmem [thread:$0]  %s16, 1024, %s18, [#allocation3], 64, 64, 4
    $region5: #{tpu_custom_call.1} parent=1 // pred_fallthru
      _
    // Predicated region
    $region6: #{tpu_custom_call.1} parent=1 // pred_check
      _
    $region7: #{tpu_custom_call.1} parent=1 // pred_check_branch
      %25 = sbr.rel (0) target = $region9
    $region8: #{tpu_custom_call.1} parent=1 // pred_region
      %27 = vsyncadd [#allocation6], 0
      %s28 = sshll.u32 %s1, 4
      %s29 = int_to_ptr.hbm [resolvable:$true] %s28
      %s30 = sshll.u32 [#allocation5], 4
      %s31 = int_to_ptr.vmem [resolvable:$true] %s30
      %36 = dma.hbm_to_vmem [thread:$0]  %s29, 1024, %s31, [#allocation6], 64, 64, 4
    $region9: #{tpu_custom_call.1} parent=1 // pred_fallthru
      _
    // Predicated region
    $region10: #{tpu_custom_call.1} parent=1 // pred_check
      _
    $region11: #{tpu_custom_call.1} parent=1 // pred_check_branch
      %38 = sbr.rel (0) target = $region13
    $region12: #{tpu_custom_call.1} parent=1 // pred_region
      _
    $region13: #{tpu_custom_call.1} parent=1 // pred_fallthru
      _
    // Predicated region
    $region14: #{tpu_custom_call.1} parent=1 // pred_check
      _
    $region15: #{tpu_custom_call.1} parent=1 // pred_check_branch
      %40 = sbr.rel (0) target = $region17
    $region16: #{tpu_custom_call.1} parent=1 // pred_region
      %42 = dma.done [#allocation3], 1024
    $region17: #{tpu_custom_call.1} parent=1 // pred_fallthru
      _
    // Predicated region
    $region18: #{tpu_custom_call.1} parent=1 // pred_check
      _
    $region19: #{tpu_custom_call.1} parent=1 // pred_check_branch
      %44 = sbr.rel (0) target = $region21
    $region20: #{tpu_custom_call.1} parent=1 // pred_region
      %46 = dma.done [#allocation6], 1024
    $region21: #{tpu_custom_call.1} parent=1 // pred_fallthru
      _
    %p47 = scmp.eq.s32.totalorder 0, 0
    // Predicated region
    $region22: #{tpu_custom_call.1} parent=1 // pred_check
      %p48 = pneg %p47
    $region23: #{tpu_custom_call.1} parent=1 // pred_check_branch
      %50 = sbr.rel (%p48) target = $region25
    $region24: #{tpu_custom_call.1} parent=1 // pred_region
      %51 = vst [vmem:[#allocation7] sm:$0xff] 0.0
      %52 = vst [vmem:[#allocation7 + $0x8] sm:$0xff] 0.0
      %53 = vst [vmem:[#allocation7 + $0x10] sm:$0xff] 0.0
      %54 = vst [vmem:[#allocation7 + $0x18] sm:$0xff] 0.0
      %55 = vst [vmem:[#allocation7 + $0x20] sm:$0xff] 0.0
      %56 = vst [vmem:[#allocation7 + $0x28] sm:$0xff] 0.0
      %57 = vst [vmem:[#allocation7 + $0x30] sm:$0xff] 0.0
      %58 = vst [vmem:[#allocation7 + $0x38] sm:$0xff] 0.0
      %59 = vst [vmem:[#allocation7 + $0x40] sm:$0xff] 0.0
      %60 = vst [vmem:[#allocation7 + $0x48] sm:$0xff] 0.0
      %61 = vst [vmem:[#allocation7 + $0x50] sm:$0xff] 0.0
      %62 = vst [vmem:[#allocation7 + $0x58] sm:$0xff] 0.0
      %63 = vst [vmem:[#allocation7 + $0x60] sm:$0xff] 0.0
      %64 = vst [vmem:[#allocation7 + $0x68] sm:$0xff] 0.0
      %65 = vst [vmem:[#allocation7 + $0x70] sm:$0xff] 0.0
      %66 = vst [vmem:[#allocation7 + $0x78] sm:$0xff] 0.0
    $region25: #{tpu_custom_call.1} parent=1 // pred_fallthru
      _
    %s67 = smul.u32 0, 128
    %s68 = sshra.s32 %s67, 3
    %s69 = sand.u32 %s67, 7
    %s70 = smul.addr %s68, 4
    %s71 = scalar_lea.vmem [#allocation5], %s70
    %v72 = vld [vmem:[%s71] sm:$0xf]
    %v73 = vld [vmem:[%s71 + $0x4] sm:$0xf]
    %v74 = vld [vmem:[%s71 + $0x8] sm:$0xf]
    %v75 = vld [vmem:[%s71 + $0xc] sm:$0xf]
    %v76 = vld [vmem:[%s71 + $0x10] sm:$0xf]
    %v77 = vld [vmem:[%s71 + $0x14] sm:$0xf]
    %v78 = vld [vmem:[%s71 + $0x18] sm:$0xf]
    %v79 = vld [vmem:[%s71 + $0x1c] sm:$0xf]
    %v80 = vld [vmem:[%s71 + $0x20] sm:$0xf]
    %v81 = vld [vmem:[%s71 + $0x24] sm:$0xf]
    %v82 = vld [vmem:[%s71 + $0x28] sm:$0xf]
    %v83 = vld [vmem:[%s71 + $0x2c] sm:$0xf]
    %v84 = vld [vmem:[%s71 + $0x30] sm:$0xf]
    %v85 = vld [vmem:[%s71 + $0x34] sm:$0xf]
    %v86 = vld [vmem:[%s71 + $0x38] sm:$0xf]
    %v87 = vld [vmem:[%s71 + $0x3c] sm:$0xf]
    %v88 = vld [vmem:[#allocation7] sm:$0xff]
    %v89 = vld [vmem:[#allocation7 + $0x8] sm:$0xff]
    %v90 = vld [vmem:[#allocation7 + $0x10] sm:$0xff]
    %v91 = vld [vmem:[#allocation7 + $0x18] sm:$0xff]
    %v92 = vld [vmem:[#allocation7 + $0x20] sm:$0xff]
    %v93 = vld [vmem:[#allocation7 + $0x28] sm:$0xff]
    %v94 = vld [vmem:[#allocation7 + $0x30] sm:$0xff]
    %v95 = vld [vmem:[#allocation7 + $0x38] sm:$0xff]
    %v96 = vld [vmem:[#allocation7 + $0x40] sm:$0xff]
    %v97 = vld [vmem:[#allocation7 + $0x48] sm:$0xff]
    %v98 = vld [vmem:[#allocation7 + $0x50] sm:$0xff]
    %v99 = vld [vmem:[#allocation7 + $0x58] sm:$0xff]
    %v100 = vld [vmem:[#allocation7 + $0x60] sm:$0xff]
    %v101 = vld [vmem:[#allocation7 + $0x68] sm:$0xff]
    %v102 = vld [vmem:[#allocation7 + $0x70] sm:$0xff]
    %v103 = vld [vmem:[#allocation7 + $0x78] sm:$0xff]
    %v104 = vld [vmem:[#allocation2] sm:$0xf]
    %v105 = vld [vmem:[#allocation2 + $0x4] sm:$0xf]
    %v106 = vld [vmem:[#allocation2 + $0x8] sm:$0xf]
    %v107 = vld [vmem:[#allocation2 + $0xc] sm:$0xf]
    %v108 = vld [vmem:[#allocation2 + $0x10] sm:$0xf]
    %v109 = vld [vmem:[#allocation2 + $0x14] sm:$0xf]
    %v110 = vld [vmem:[#allocation2 + $0x18] sm:$0xf]
    %v111 = vld [vmem:[#allocation2 + $0x1c] sm:$0xf]
    %v112 = vld [vmem:[#allocation2 + $0x20] sm:$0xf]
    %v113 = vld [vmem:[#allocation2 + $0x24] sm:$0xf]
    %v114 = vld [vmem:[#allocation2 + $0x28] sm:$0xf]
    %v115 = vld [vmem:[#allocation2 + $0x2c] sm:$0xf]
    %v116 = vld [vmem:[#allocation2 + $0x30] sm:$0xf]
    %v117 = vld [vmem:[#allocation2 + $0x34] sm:$0xf]
    %v118 = vld [vmem:[#allocation2 + $0x38] sm:$0xf]
    %v119 = vld [vmem:[#allocation2 + $0x3c] sm:$0xf]
    %v136 = vunpack.c.l.b16 %v104
    %v137 = vunpack.c.l.b16 %v105
    %v138 = vunpack.c.l.b16 %v106
    %v139 = vunpack.c.l.b16 %v107
    %v140 = vunpack.c.l.b16 %v108
    %v141 = vunpack.c.l.b16 %v109
    %v142 = vunpack.c.l.b16 %v110
    %v143 = vunpack.c.l.b16 %v111
    %v144 = vunpack.c.l.b16 %v112
    %v145 = vunpack.c.l.b16 %v113
    %v146 = vunpack.c.l.b16 %v114
    %v147 = vunpack.c.l.b16 %v115
    %v148 = vunpack.c.l.b16 %v116
    %v149 = vunpack.c.l.b16 %v117
    %v150 = vunpack.c.l.b16 %v118
    %v151 = vunpack.c.l.b16 %v119
    %v152 = vpack.c.b16 %v137, %v136
    %v153 = vpack.c.b16 %v139, %v138
    %v154 = vpack.c.b16 %v141, %v140
    %v155 = vpack.c.b16 %v143, %v142
    %v156 = vpack.c.b16 %v145, %v144
    %v157 = vpack.c.b16 %v147, %v146
    %v158 = vpack.c.b16 %v149, %v148
    %v159 = vpack.c.b16 %v151, %v150
    %v184 = vunpack.c.l.b16 %v72
    %v185 = vunpack.c.l.b16 %v73
    %v186 = vunpack.c.l.b16 %v74
    %v187 = vunpack.c.l.b16 %v75
    %v188 = vunpack.c.l.b16 %v76
    %v189 = vunpack.c.l.b16 %v77
    %v190 = vunpack.c.l.b16 %v78
    %v191 = vunpack.c.l.b16 %v79
    %v192 = vunpack.c.l.b16 %v80
    %v193 = vunpack.c.l.b16 %v81
    %v194 = vunpack.c.l.b16 %v82
    %v195 = vunpack.c.l.b16 %v83
    %v196 = vunpack.c.l.b16 %v84
    %v197 = vunpack.c.l.b16 %v85
    %v198 = vunpack.c.l.b16 %v86
    %v199 = vunpack.c.l.b16 %v87
    %v200 = vpack.c.b16 %v185, %v184
    %v201 = vpack.c.b16 %v187, %v186
    %v202 = vpack.c.b16 %v189, %v188
    %v203 = vpack.c.b16 %v191, %v190
    %v204 = vpack.c.b16 %v193, %v192
    %v205 = vpack.c.b16 %v195, %v194
    %v206 = vpack.c.b16 %v197, %v196
    %v207 = vpack.c.b16 %v199, %v198
    %216 = vmatpush.bf16.msra.mxu0 %v207
    %217 = vmatpush.bf16.msra.mxu0 %v206
    %218 = vmatpush.bf16.msra.mxu0 %v205
    %219 = vmatpush.bf16.msra.mxu0 %v204
    %220 = vmatpush.bf16.msra.mxu0 %v203
    %221 = vmatpush.bf16.msra.mxu0 %v202
    %222 = vmatpush.bf16.msra.mxu0 %v201
    %223 = vmatpush.bf16.msra.mxu0 %v200
    %224 = vmatmul.bf16.gmra.mxu0 %v152
    %v225 = vpop.f32.mrf.mxu0
    %v226 = vadd.f32 0.0, %v225
    %v227 = vpop.f32.mrf.mxu0
    %v228 = vadd.f32 0.0, %v227
    %229 = vmatmul.bf16.gmra.mxu0 %v153
    %v230 = vpop.f32.mrf.mxu0
    %v231 = vadd.f32 0.0, %v230
    %v232 = vpop.f32.mrf.mxu0
    %v233 = vadd.f32 0.0, %v232
    %234 = vmatmul.bf16.gmra.mxu0 %v154
    %v235 = vpop.f32.mrf.mxu0
    %v236 = vadd.f32 0.0, %v235
    %v237 = vpop.f32.mrf.mxu0
    %v238 = vadd.f32 0.0, %v237
    %239 = vmatmul.bf16.gmra.mxu0 %v155
    %v240 = vpop.f32.mrf.mxu0
    %v241 = vadd.f32 0.0, %v240
    %v242 = vpop.f32.mrf.mxu0
    %v243 = vadd.f32 0.0, %v242
    %244 = vmatmul.bf16.gmra.mxu0 %v156
    %v245 = vpop.f32.mrf.mxu0
    %v246 = vadd.f32 0.0, %v245
    %v247 = vpop.f32.mrf.mxu0
    %v248 = vadd.f32 0.0, %v247
    %249 = vmatmul.bf16.gmra.mxu0 %v157
    %v250 = vpop.f32.mrf.mxu0
    %v251 = vadd.f32 0.0, %v250
    %v252 = vpop.f32.mrf.mxu0
    %v253 = vadd.f32 0.0, %v252
    %254 = vmatmul.bf16.gmra.mxu0 %v158
    %v255 = vpop.f32.mrf.mxu0
    %v256 = vadd.f32 0.0, %v255
    %v257 = vpop.f32.mrf.mxu0
    %v258 = vadd.f32 0.0, %v257
    %259 = vmatmul.bf16.gmra.mxu0 %v159
    %v260 = vpop.f32.mrf.mxu0
    %v261 = vadd.f32 0.0, %v260
    %v262 = vpop.f32.mrf.mxu0
    %v263 = vadd.f32 0.0, %v262
    %264 = vdwg.mxu0
    %v265 = vadd.f32 %v88, %v226
    %v266 = vadd.f32 %v89, %v228
    %v267 = vadd.f32 %v90, %v231
    %v268 = vadd.f32 %v91, %v233
    %v269 = vadd.f32 %v92, %v236
    %v270 = vadd.f32 %v93, %v238
    %v271 = vadd.f32 %v94, %v241
    %v272 = vadd.f32 %v95, %v243
    %v273 = vadd.f32 %v96, %v246
    %v274 = vadd.f32 %v97, %v248
    %v275 = vadd.f32 %v98, %v251
    %v276 = vadd.f32 %v99, %v253
    %v277 = vadd.f32 %v100, %v256
    %v278 = vadd.f32 %v101, %v258
    %v279 = vadd.f32 %v102, %v261
    %v280 = vadd.f32 %v103, %v263
    %281 = vst [vmem:[#allocation7] sm:$0xff] %v265
    %282 = vst [vmem:[#allocation7 + $0x8] sm:$0xff] %v266
    %283 = vst [vmem:[#allocation7 + $0x10] sm:$0xff] %v267
    %284 = vst [vmem:[#allocation7 + $0x18] sm:$0xff] %v268
    %285 = vst [vmem:[#allocation7 + $0x20] sm:$0xff] %v269
    %286 = vst [vmem:[#allocation7 + $0x28] sm:$0xff] %v270
    %287 = vst [vmem:[#allocation7 + $0x30] sm:$0xff] %v271
    %288 = vst [vmem:[#allocation7 + $0x38] sm:$0xff] %v272
    %289 = vst [vmem:[#allocation7 + $0x40] sm:$0xff] %v273
    %290 = vst [vmem:[#allocation7 + $0x48] sm:$0xff] %v274
    %291 = vst [vmem:[#allocation7 + $0x50] sm:$0xff] %v275
    %292 = vst [vmem:[#allocation7 + $0x58] sm:$0xff] %v276
    %293 = vst [vmem:[#allocation7 + $0x60] sm:$0xff] %v277
    %294 = vst [vmem:[#allocation7 + $0x68] sm:$0xff] %v278
    %295 = vst [vmem:[#allocation7 + $0x70] sm:$0xff] %v279
    %296 = vst [vmem:[#allocation7 + $0x78] sm:$0xff] %v280
    // Predicated region
    $region26: #{tpu_custom_call.1} parent=1 // pred_check
      %p297 = pneg %p47
    $region27: #{tpu_custom_call.1} parent=1 // pred_check_branch
      %299 = sbr.rel (%p297) target = $region29
    $region28: #{tpu_custom_call.1} parent=1 // pred_region
      %v300 = vld [vmem:[#allocation7] sm:$0xff]
      %v301 = vld [vmem:[#allocation7 + $0x8] sm:$0xff]
      %v302 = vld [vmem:[#allocation7 + $0x10] sm:$0xff]
      %v303 = vld [vmem:[#allocation7 + $0x18] sm:$0xff]
      %v304 = vld [vmem:[#allocation7 + $0x20] sm:$0xff]
      %v305 = vld [vmem:[#allocation7 + $0x28] sm:$0xff]
      %v306 = vld [vmem:[#allocation7 + $0x30] sm:$0xff]
      %v307 = vld [vmem:[#allocation7 + $0x38] sm:$0xff]
      %v308 = vld [vmem:[#allocation7 + $0x40] sm:$0xff]
      %v309 = vld [vmem:[#allocation7 + $0x48] sm:$0xff]
      %v310 = vld [vmem:[#allocation7 + $0x50] sm:$0xff]
      %v311 = vld [vmem:[#allocation7 + $0x58] sm:$0xff]
      %v312 = vld [vmem:[#allocation7 + $0x60] sm:$0xff]
      %v313 = vld [vmem:[#allocation7 + $0x68] sm:$0xff]
      %v314 = vld [vmem:[#allocation7 + $0x70] sm:$0xff]
      %v315 = vld [vmem:[#allocation7 + $0x78] sm:$0xff]
      %v316 = vld [vmem:[%s2] sm:$0x1]
      %v318 = vperm.slane %v316, 0
      %v320 = vadd.f32 %v300, %v318
      %v321 = vadd.f32 %v301, %v318
      %v322 = vadd.f32 %v302, %v318
      %v323 = vadd.f32 %v303, %v318
      %v324 = vadd.f32 %v304, %v318
      %v325 = vadd.f32 %v305, %v318
      %v326 = vadd.f32 %v306, %v318
      %v327 = vadd.f32 %v307, %v318
      %v328 = vadd.f32 %v308, %v318
      %v329 = vadd.f32 %v309, %v318
      %v330 = vadd.f32 %v310, %v318
      %v331 = vadd.f32 %v311, %v318
      %v332 = vadd.f32 %v312, %v318
      %v333 = vadd.f32 %v313, %v318
      %v334 = vadd.f32 %v314, %v318
      %v335 = vadd.f32 %v315, %v318
      %v336 = vmax.f32 %v320, 0.0
      %v337 = vmax.f32 %v321, 0.0
      %v338 = vmax.f32 %v322, 0.0
      %v339 = vmax.f32 %v323, 0.0
      %v340 = vmax.f32 %v324, 0.0
      %v341 = vmax.f32 %v325, 0.0
      %v342 = vmax.f32 %v326, 0.0
      %v343 = vmax.f32 %v327, 0.0
      %v344 = vmax.f32 %v328, 0.0
      %v345 = vmax.f32 %v329, 0.0
      %v346 = vmax.f32 %v330, 0.0
      %v347 = vmax.f32 %v331, 0.0
      %v348 = vmax.f32 %v332, 0.0
      %v349 = vmax.f32 %v333, 0.0
      %v350 = vmax.f32 %v334, 0.0
      %v351 = vmax.f32 %v335, 0.0
      %352 = vst [vmem:[#allocation7] sm:$0xff] %v336
      %353 = vst [vmem:[#allocation7 + $0x8] sm:$0xff] %v337
      %354 = vst [vmem:[#allocation7 + $0x10] sm:$0xff] %v338
      %355 = vst [vmem:[#allocation7 + $0x18] sm:$0xff] %v339
      %356 = vst [vmem:[#allocation7 + $0x20] sm:$0xff] %v340
      %357 = vst [vmem:[#allocation7 + $0x28] sm:$0xff] %v341
      %358 = vst [vmem:[#allocation7 + $0x30] sm:$0xff] %v342
      %359 = vst [vmem:[#allocation7 + $0x38] sm:$0xff] %v343
      %360 = vst [vmem:[#allocation7 + $0x40] sm:$0xff] %v344
      %361 = vst [vmem:[#allocation7 + $0x48] sm:$0xff] %v345
      %362 = vst [vmem:[#allocation7 + $0x50] sm:$0xff] %v346
      %363 = vst [vmem:[#allocation7 + $0x58] sm:$0xff] %v347
      %364 = vst [vmem:[#allocation7 + $0x60] sm:$0xff] %v348
      %365 = vst [vmem:[#allocation7 + $0x68] sm:$0xff] %v349
      %366 = vst [vmem:[#allocation7 + $0x70] sm:$0xff] %v350
      %367 = vst [vmem:[#allocation7 + $0x78] sm:$0xff] %v351
    $region29: #{tpu_custom_call.1} parent=1 // pred_fallthru
      _
    // Predicated region
    $region30: #{tpu_custom_call.1} parent=1 // pred_check
      _
    $region31: #{tpu_custom_call.1} parent=1 // pred_check_branch
      %369 = sbr.rel (0) target = $region33
    $region32: #{tpu_custom_call.1} parent=1 // pred_region
      %371 = vsyncadd [#allocation4], 0
      %s372 = sshll.u32 [#allocation7], 4
      %s373 = int_to_ptr.vmem [resolvable:$true] %s372
      %s374 = sshll.u32 %s3, 4
      %s375 = int_to_ptr.hbm [resolvable:$true] %s374
      %380 = dma.vmem_to_hbm [thread:$0]  %s373, 2048, %s375, [#allocation4], 128, 128, 8
    $region33: #{tpu_custom_call.1} parent=1 // pred_fallthru
      _
    // Predicated region
    $region34: #{tpu_custom_call.1} parent=1 // pred_check
      _
    $region35: #{tpu_custom_call.1} parent=1 // pred_check_branch
      %382 = sbr.rel (0) target = $region37
    $region36: #{tpu_custom_call.1} parent=1 // pred_region
      %384 = dma.done [#allocation4], 2048
    $region37: #{tpu_custom_call.1} parent=1 // pred_fallthru
      _
    %385 = vsyncpa [#allocation3], 1
    %386 = vsyncpa [#allocation6], 1
    %387 = vsyncpa [#allocation4], 1

</llo_original>
